<compile_context>
chip_gen: v6e
topology: v6e:2x2x1
jax: 0.10.0
libtpu: 0.0.40
codegen_flags: <defaults>
</compile_context>

<pallas_src>
import math
import numpy as np
import jax
import jax.numpy as jnp
from jax.experimental import pallas as pl
from jax.experimental.pallas import tpu as pltpu

# ------------------------- model hyper-parameters (small) -------------------------
PARAM_DIM = 256     # param_dim
HIDDEN_DIM = 256    # hidden_dim (module default 1024; small for the demo)
RANK = 128          # rank
T1 = 32             # time_embed first width (fixed by the module)
T2 = 64             # time_embed second width (fixed by the module)
LN_EPS = 1e-5

_HI = jax.lax.Precision.HIGHEST  # only for one-time host-side weight folding


# ------------------------------ in-kernel helpers ---------------------------------
_SQRT_2_OVER_PI = 0.7978845608028654


def _gelu_tanh(x):
    # tanh-GELU: one EUP tanh + ~7 VPU ops per element (vs ~15+ VPU ops + exp +
    # divide for the erf polynomial).  Max activation-level deviation from exact
    # erf-GELU ~3e-3; end-to-end output deviation here ~1e-6 (checked below).
    x3 = x * x * x
    return 0.5 * x * (1.0 + jnp.tanh(_SQRT_2_OVER_PI * (x + 0.044715 * x3)))


def _layer_norm(x, gamma, beta):
    # One-pass LN: mean and E[x^2] in the same sweep, var = E[x^2] - mean^2.
    mean = jnp.mean(x, axis=-1, keepdims=True)
    mean_sq = jnp.mean(x * x, axis=-1, keepdims=True)
    var = mean_sq - mean * mean
    return (x - mean) * jax.lax.rsqrt(var + LN_EPS) * gamma + beta


def _bdot(a, b):
    # bf16 MXU matmul, f32 accumulate (single MXU pass on all generations).
    return jnp.dot(a.astype(jnp.bfloat16), b, preferred_element_type=jnp.float32)


# ----------------------------------- kernel ----------------------------------------
def flow_matching_kernel(
    z_ref, t_ref,
    wt1_ref, bt1_ref, w_t_ref,                    # time_embed (2nd matmul folded into layer 1)
    w_in_ref, b1_ref, g1_ref, be1_ref,            # low_rank_proj folded into main layer 1 + LN
    w2_ref, b2_ref, g2_ref, be2_ref,              # main layer 2 + LN
    w_out_ref, b_out_ref,                         # main layer 3 folded into inv_proj
    out_ref,
):
    # ---- time_embed first stage: Linear(1, 32) -> SiLU ----
    t = t_ref[...]                                   # [TB, 1] f32
    h = t * wt1_ref[...] + bt1_ref[...]              # K=1 matmul as broadcast mul -> [TB, 32]
    h = h * jax.nn.sigmoid(h)                        # SiLU (sigmoid on EUP)

    # ---- main layer 1 (low_rank_proj, concat and time_embed tail all folded):
    #   cat([z@Wlr + blr, silu_h@Wt2 + bt2]) @ W1
    #     == z @ (Wlr@W1z) + silu_h @ (Wt2@W1t) + (blr@W1z + bt2@W1t + b1)
    h1 = (_bdot(z_ref[...], w_in_ref[...])           # [TB, HIDDEN]
          + _bdot(h, w_t_ref[...])
          + b1_ref[...])
    h1 = _gelu_tanh(_layer_norm(h1, g1_ref[...], be1_ref[...]))
    # Dropout(0.1): identity at inference (eval mode)

    # ---- main layer 2 ----
    h2 = _bdot(h1, w2_ref[...]) + b2_ref[...]
    h2 = _gelu_tanh(_layer_norm(h2, g2_ref[...], be2_ref[...]))
    # Dropout(0.1): identity at inference (eval mode)

    # ---- main layer 3 folded into inv_proj:  (h2@W3 + b3)@Winv + binv ----
    out_ref[...] = _bdot(h2, w_out_ref[...]) + b_out_ref[...]


# ------------------------------ weight preparation ----------------------------------
def prepare_params(raw):
    """One-time host-side fold of the rank-128 projections and the time_embed tail,
    plus bf16 cast of all matmul weights (biases / LN params stay f32)."""
    (wt1, bt1, wt2, bt2, wlr, blr, w1z, w1t, b1, g1, be1,
     w2, b2, g2, be2, w3, b3, winv, binv) = raw
    w_in = jnp.dot(wlr, w1z, precision=_HI)                          # [P, H]
    w_t = jnp.dot(wt2, w1t, precision=_HI)                           # [T1, H]
    b1f = b1 + jnp.dot(blr, w1z, precision=_HI) \
              + jnp.dot(bt2, w1t, precision=_HI)                     # [1, H]
    w_out = jnp.dot(w3, winv, precision=_HI)                         # [H, P]
    b_out = binv + jnp.dot(b3, winv, precision=_HI)                  # [1, P]
    bf = jnp.bfloat16
    return (wt1, bt1, w_t.astype(bf),
            w_in.astype(bf), b1f, g1, be1,
            w2.astype(bf), b2, g2, be2,
            w_out.astype(bf), b_out)


# ----------------------------------- wrapper ----------------------------------------
def _round_up(x, m):
    return ((x + m - 1) // m) * m


def _plan_batch(B):
    """Pick (batch tile, padded batch).  Prefer no padding; for large batches keep the
    tile a multiple of 128 (MXU M-dim), <= 1024 rows, and grid >= 2 so the 'parallel'
    batch axis can shard across v7x's two TensorCores."""
    if B < 256:
        return B, B                                   # one full-batch tile, no padding
    limit = min(1024, B // 2)                         # grid >= 2
    limit = max(128, (limit // 128) * 128)
    for tb in range(limit, 127, -128):                # prefer a tile that divides B exactly
        if B % tb == 0:
            return tb, B
    tb = limit
    return tb, _round_up(B, tb)


def flow_matching_forward(z, t, prepped, tb=None):
    """z: [B, PARAM_DIM] float32, t: [B, 1] float32. prepped = prepare_params(raw)."""
    if z.ndim == 1:
        z = z[None, :]
    if t.ndim == 1:
        t = t[:, None]
    B, P = z.shape
    assert P == PARAM_DIM

    if tb is None:
        tb, Bp = _plan_batch(B)
    else:
        Bp = _round_up(B, tb)

    z_p = z.astype(jnp.float32)
    t_p = t.astype(jnp.float32)
    if Bp != B:  # pad only when a remainder actually exists (avoids a full HBM copy)
        z_p = jnp.pad(z_p, ((0, Bp - B), (0, 0)))
        t_p = jnp.pad(t_p, ((0, Bp - B), (0, 0)))

    def batch_spec(ncols):
        return pl.BlockSpec((tb, ncols), lambda i: (i, 0))

    def weight_spec(p):
        return pl.BlockSpec(p.shape, lambda i: (0, 0))   # resident across the grid

    in_specs = [batch_spec(P), batch_spec(1)] + [weight_spec(p) for p in prepped]

    # Advisory cost estimate (per-row MXU flops + EUP transcendentals).
    flops = 2 * Bp * (T1                              # time embed K=1 (VPU)
                      + T1 * HIDDEN_DIM               # folded time tail
                      + P * HIDDEN_DIM                # folded low-rank + layer 1
                      + HIDDEN_DIM * HIDDEN_DIM       # layer 2
                      + HIDDEN_DIM * P)               # layer 3 folded into inv_proj
    transcendentals = Bp * (T1 + 2 * HIDDEN_DIM)      # sigmoid + 2x tanh-GELU
    bytes_accessed = (z_p.size + t_p.size + Bp * P) * 4 \
        + sum(int(p.size) * p.dtype.itemsize for p in prepped)

    out = pl.pallas_call(
        flow_matching_kernel,
        out_shape=jax.ShapeDtypeStruct((Bp, P), jnp.float32),
        grid_spec=pltpu.PrefetchScalarGridSpec(
            num_scalar_prefetch=0,
            grid=(Bp // tb,),
            in_specs=in_specs,
            out_specs=batch_spec(P),
        ),
        compiler_params=pltpu.CompilerParams(
            dimension_semantics=("parallel",)),
        cost_estimate=pl.CostEstimate(
            flops=int(flops), transcendentals=int(transcendentals),
            bytes_accessed=int(bytes_accessed)),
    )(z_p, t_p, *prepped)
    return out[:B]


# ------------------------------ parameter initialization ----------------------------
def init_params(key):
    # xavier_normal_(gain=0.02) on Linear weights, zero biases,
    # LayerNorm gamma=1 / beta=0 (module defaults).  Deterministic synthetic init.
    def xavier(k, fan_in, fan_out):
        std = 0.02 * math.sqrt(2.0 / (fan_in + fan_out))
        return std * jax.random.normal(k, (fan_in, fan_out), dtype=jnp.float32)

    ks = jax.random.split(key, 7)
    wt1 = xavier(ks[0], 1, T1);            bt1 = jnp.zeros((1, T1), jnp.float32)
    wt2 = xavier(ks[1], T1, T2);           bt2 = jnp.zeros((1, T2), jnp.float32)
    wlr = xavier(ks[2], PARAM_DIM, RANK);  blr = jnp.zeros((1, RANK), jnp.float32)
    w1 = xavier(ks[3], RANK + T2, HIDDEN_DIM)
    w1z, w1t = w1[:RANK], w1[RANK:]
    b1 = jnp.zeros((1, HIDDEN_DIM), jnp.float32)
    g1 = jnp.ones((1, HIDDEN_DIM), jnp.float32);  be1 = jnp.zeros((1, HIDDEN_DIM), jnp.float32)
    w2 = xavier(ks[4], HIDDEN_DIM, HIDDEN_DIM);   b2 = jnp.zeros((1, HIDDEN_DIM), jnp.float32)
    g2 = jnp.ones((1, HIDDEN_DIM), jnp.float32);  be2 = jnp.zeros((1, HIDDEN_DIM), jnp.float32)
    w3 = xavier(ks[5], HIDDEN_DIM, RANK);         b3 = jnp.zeros((1, RANK), jnp.float32)
    winv = xavier(ks[6], RANK, PARAM_DIM);        binv = jnp.zeros((1, PARAM_DIM), jnp.float32)
    return (wt1, bt1, wt2, bt2, wlr, blr, w1z, w1t, b1, g1, be1,
            w2, b2, g2, be2, w3, b3, winv, binv)


# ------------------------------ plain-JAX reference ----------------------------------
def reference_forward(z, t, raw):
    # Unfused, full-precision f32 reference matching the PyTorch module structure
    # (exact erf-GELU, two-pass LayerNorm, no folding).
    (wt1, bt1, wt2, bt2, wlr, blr, w1z, w1t, b1, g1, be1,
     w2, b2, g2, be2, w3, b3, winv, binv) = raw

    def ln(x, g, b):
        m = jnp.mean(x, -1, keepdims=True)
        v = jnp.mean((x - m) ** 2, -1, keepdims=True)
        return (x - m) / jnp.sqrt(v + LN_EPS) * g + b

    def gelu(x):  # exact erf GELU (nn.GELU() default)
        return 0.5 * x * (1.0 + jax.scipy.special.erf(x / jnp.sqrt(2.0)))

    dot = lambda a, b: jnp.dot(a, b, precision=_HI)
    h = t * wt1 + bt1
    h = h * jax.nn.sigmoid(h)
    te = dot(h, wt2) + bt2
    zr = dot(z, wlr) + blr
    x = jnp.concatenate([zr, te], axis=-1)
    w1 = jnp.concatenate([w1z, w1t], axis=0)
    h1 = gelu(ln(dot(x, w1) + b1, g1, be1))
    h2 = gelu(ln(dot(h1, w2) + b2, g2, be2))
    h3 = dot(h2, w3) + b3
    return dot(h3, winv) + binv


# ----------------------------------------- main --------------------------------------
if __name__ == "__main__":
    key = jax.random.PRNGKey(0)
    kp, kz, kt = jax.random.split(key, 3)
    raw_params = init_params(kp)
    prepped = prepare_params(raw_params)

    B = 2
    z = jax.random.normal(kz, (B, PARAM_DIM), dtype=jnp.float32)   # noisy parameter vectors
    t = jax.random.uniform(kt, (B, 1), dtype=jnp.float32)          # flow-matching times in [0, 1)

    out = jax.block_until_ready(flow_matching_forward(z, t, prepped))
    ref = reference_forward(z, t, raw_params)
    np.testing.assert_allclose(np.asarray(out), np.asarray(ref), rtol=1e-2, atol=1e-4)
    print("KERNEL_OK")
</pallas_src>

<mosaic_0001>
module attributes {stable_mosaic.version = 11 : i64} {
  func.func @flow_matching_kernel(%arg0: i32, %arg1: memref<2x256xf32, #tpu.memory_space<vmem>>, %arg2: memref<2x1xf32, #tpu.memory_space<vmem>>, %arg3: memref<1x32xf32, #tpu.memory_space<vmem>>, %arg4: memref<1x32xf32, #tpu.memory_space<vmem>>, %arg5: memref<32x256xbf16, #tpu.memory_space<vmem>>, %arg6: memref<256x256xbf16, #tpu.memory_space<vmem>>, %arg7: memref<1x256xf32, #tpu.memory_space<vmem>>, %arg8: memref<1x256xf32, #tpu.memory_space<vmem>>, %arg9: memref<1x256xf32, #tpu.memory_space<vmem>>, %arg10: memref<256x256xbf16, #tpu.memory_space<vmem>>, %arg11: memref<1x256xf32, #tpu.memory_space<vmem>>, %arg12: memref<1x256xf32, #tpu.memory_space<vmem>>, %arg13: memref<1x256xf32, #tpu.memory_space<vmem>>, %arg14: memref<256x256xbf16, #tpu.memory_space<vmem>>, %arg15: memref<1x256xf32, #tpu.memory_space<vmem>>, %arg16: memref<2x256xf32, #tpu.memory_space<vmem>>) attributes {dimension_semantics = [#tpu.dimension_semantics<parallel>], iteration_bounds = array<i64: 1>, scalar_prefetch = 0 : i64, scratch_operands = 0 : i64, tpu.core_type = #tpu.core_type<tc>, window_params = [{transform_indices = @transform_0, window_bounds = array<i64: 2, 256>}, {transform_indices = @transform_1, window_bounds = array<i64: 2, 1>}, {pipeline_mode = #tpu.pipeline_mode<synchronous>, transform_indices = @transform_2, window_bounds = array<i64: 1, 32>}, {pipeline_mode = #tpu.pipeline_mode<synchronous>, transform_indices = @transform_3, window_bounds = array<i64: 1, 32>}, {pipeline_mode = #tpu.pipeline_mode<synchronous>, transform_indices = @transform_4, window_bounds = array<i64: 32, 256>}, {pipeline_mode = #tpu.pipeline_mode<synchronous>, transform_indices = @transform_5, window_bounds = array<i64: 256, 256>}, {pipeline_mode = #tpu.pipeline_mode<synchronous>, transform_indices = @transform_6, window_bounds = array<i64: 1, 256>}, {pipeline_mode = #tpu.pipeline_mode<synchronous>, transform_indices = @transform_7, window_bounds = array<i64: 1, 256>}, {pipeline_mode = #tpu.pipeline_mode<synchronous>, transform_indices = @transform_8, window_bounds = array<i64: 1, 256>}, {pipeline_mode = #tpu.pipeline_mode<synchronous>, transform_indices = @transform_9, window_bounds = array<i64: 256, 256>}, {pipeline_mode = #tpu.pipeline_mode<synchronous>, transform_indices = @transform_10, window_bounds = array<i64: 1, 256>}, {pipeline_mode = #tpu.pipeline_mode<synchronous>, transform_indices = @transform_11, window_bounds = array<i64: 1, 256>}, {pipeline_mode = #tpu.pipeline_mode<synchronous>, transform_indices = @transform_12, window_bounds = array<i64: 1, 256>}, {pipeline_mode = #tpu.pipeline_mode<synchronous>, transform_indices = @transform_13, window_bounds = array<i64: 256, 256>}, {pipeline_mode = #tpu.pipeline_mode<synchronous>, transform_indices = @transform_14, window_bounds = array<i64: 1, 256>}, {transform_indices = @transform_15, window_bounds = array<i64: 2, 256>}]} {
    %c0 = arith.constant 0 : index
    %c0_0 = arith.constant 0 : index
    %0 = vector.load %arg2[%c0, %c0_0] : memref<2x1xf32, #tpu.memory_space<vmem>>, vector<2x1xf32>
    %c0_1 = arith.constant 0 : index
    %c0_2 = arith.constant 0 : index
    %1 = vector.load %arg3[%c0_1, %c0_2] : memref<1x32xf32, #tpu.memory_space<vmem>>, vector<1x32xf32>
    %2 = vector.broadcast %0 : vector<2x1xf32> to vector<2x32xf32>
    %3 = vector.broadcast %1 : vector<1x32xf32> to vector<2x32xf32>
    %4 = arith.mulf %2, %3 : vector<2x32xf32>
    %c0_3 = arith.constant 0 : index
    %c0_4 = arith.constant 0 : index
    %5 = vector.load %arg4[%c0_3, %c0_4] : memref<1x32xf32, #tpu.memory_space<vmem>>, vector<1x32xf32>
    %6 = vector.broadcast %5 : vector<1x32xf32> to vector<2x32xf32>
    %7 = arith.addf %4, %6 : vector<2x32xf32>
    %8 = arith.negf %7 : vector<2x32xf32>
    %9 = math.exp %8 : vector<2x32xf32>
    %cst = arith.constant 1.000000e+00 : f32
    %10 = vector.broadcast %cst : f32 to vector<2x32xf32>
    %11 = arith.addf %10, %9 : vector<2x32xf32>
    %12 = arith.divf %10, %11 : vector<2x32xf32>
    %13 = arith.mulf %7, %12 : vector<2x32xf32>
    %c0_5 = arith.constant 0 : index
    %c0_6 = arith.constant 0 : index
    %14 = vector.load %arg1[%c0_5, %c0_6] : memref<2x256xf32, #tpu.memory_space<vmem>>, vector<2x256xf32>
    %c0_7 = arith.constant 0 : index
    %c0_8 = arith.constant 0 : index
    %15 = vector.load %arg6[%c0_7, %c0_8] : memref<256x256xbf16, #tpu.memory_space<vmem>>, vector<256x256xbf16>
    %16 = arith.truncf %14 : vector<2x256xf32> to vector<2x256xbf16>
    %cst_9 = arith.constant dense<0.000000e+00> : vector<2x256xf32>
    %17 = tpu.matmul %16, %15, %cst_9 {dimension_numbers = #tpu.dot_dimension_numbers<[1], [0], [0], [1], [0, 0, 1, 1], [], []>} : vector<2x256xbf16>, vector<256x256xbf16>, vector<2x256xf32> -> vector<2x256xf32>
    %c0_10 = arith.constant 0 : index
    %c0_11 = arith.constant 0 : index
    %18 = vector.load %arg5[%c0_10, %c0_11] : memref<32x256xbf16, #tpu.memory_space<vmem>>, vector<32x256xbf16>
    %19 = arith.truncf %13 : vector<2x32xf32> to vector<2x32xbf16>
    %cst_12 = arith.constant dense<0.000000e+00> : vector<2x256xf32>
    %20 = tpu.matmul %19, %18, %cst_12 {dimension_numbers = #tpu.dot_dimension_numbers<[1], [0], [0], [1], [0, 0, 1, 1], [], []>} : vector<2x32xbf16>, vector<32x256xbf16>, vector<2x256xf32> -> vector<2x256xf32>
    %21 = arith.addf %17, %20 : vector<2x256xf32>
    %c0_13 = arith.constant 0 : index
    %c0_14 = arith.constant 0 : index
    %22 = vector.load %arg7[%c0_13, %c0_14] : memref<1x256xf32, #tpu.memory_space<vmem>>, vector<1x256xf32>
    %23 = vector.broadcast %22 : vector<1x256xf32> to vector<2x256xf32>
    %24 = arith.addf %21, %23 : vector<2x256xf32>
    %c0_15 = arith.constant 0 : index
    %c0_16 = arith.constant 0 : index
    %25 = vector.load %arg8[%c0_15, %c0_16] : memref<1x256xf32, #tpu.memory_space<vmem>>, vector<1x256xf32>
    %c0_17 = arith.constant 0 : index
    %c0_18 = arith.constant 0 : index
    %26 = vector.load %arg9[%c0_17, %c0_18] : memref<1x256xf32, #tpu.memory_space<vmem>>, vector<1x256xf32>
    %cst_19 = arith.constant dense<0.000000e+00> : vector<2xf32>
    %27 = vector.multi_reduction <add>, %24, %cst_19 [1] : vector<2x256xf32> to vector<2xf32>
    %28 = vector.shape_cast %27 : vector<2xf32> to vector<2x1xf32>
    %cst_20 = arith.constant 2.560000e+02 : f32
    %29 = vector.broadcast %cst_20 : f32 to vector<2x1xf32>
    %30 = arith.divf %28, %29 : vector<2x1xf32>
    %31 = arith.mulf %24, %24 : vector<2x256xf32>
    %cst_21 = arith.constant dense<0.000000e+00> : vector<2xf32>
    %32 = vector.multi_reduction <add>, %31, %cst_21 [1] : vector<2x256xf32> to vector<2xf32>
    %33 = vector.shape_cast %32 : vector<2xf32> to vector<2x1xf32>
    %cst_22 = arith.constant 2.560000e+02 : f32
    %34 = vector.broadcast %cst_22 : f32 to vector<2x1xf32>
    %35 = arith.divf %33, %34 : vector<2x1xf32>
    %36 = arith.mulf %30, %30 : vector<2x1xf32>
    %37 = arith.subf %35, %36 : vector<2x1xf32>
    %38 = vector.broadcast %30 : vector<2x1xf32> to vector<2x256xf32>
    %39 = arith.subf %24, %38 : vector<2x256xf32>
    %cst_23 = arith.constant 9.99999974E-6 : f32
    %40 = vector.broadcast %cst_23 : f32 to vector<2x1xf32>
    %41 = arith.addf %37, %40 : vector<2x1xf32>
    %42 = math.rsqrt %41 : vector<2x1xf32>
    %43 = vector.broadcast %42 : vector<2x1xf32> to vector<2x256xf32>
    %44 = arith.mulf %39, %43 : vector<2x256xf32>
    %45 = vector.broadcast %25 : vector<1x256xf32> to vector<2x256xf32>
    %46 = arith.mulf %44, %45 : vector<2x256xf32>
    %47 = vector.broadcast %26 : vector<1x256xf32> to vector<2x256xf32>
    %48 = arith.addf %46, %47 : vector<2x256xf32>
    %49 = arith.mulf %48, %48 : vector<2x256xf32>
    %50 = arith.mulf %49, %48 : vector<2x256xf32>
    %cst_24 = arith.constant 5.000000e-01 : f32
    %51 = vector.broadcast %cst_24 : f32 to vector<2x256xf32>
    %52 = arith.mulf %51, %48 : vector<2x256xf32>
    %cst_25 = arith.constant 4.471500e-02 : f32
    %53 = vector.broadcast %cst_25 : f32 to vector<2x256xf32>
    %54 = arith.mulf %53, %50 : vector<2x256xf32>
    %55 = arith.addf %48, %54 : vector<2x256xf32>
    %cst_26 = arith.constant 0.797884583 : f32
    %56 = vector.broadcast %cst_26 : f32 to vector<2x256xf32>
    %57 = arith.mulf %56, %55 : vector<2x256xf32>
    %58 = math.tanh %57 : vector<2x256xf32>
    %cst_27 = arith.constant 1.000000e+00 : f32
    %59 = vector.broadcast %cst_27 : f32 to vector<2x256xf32>
    %60 = arith.addf %59, %58 : vector<2x256xf32>
    %61 = arith.mulf %52, %60 : vector<2x256xf32>
    %c0_28 = arith.constant 0 : index
    %c0_29 = arith.constant 0 : index
    %62 = vector.load %arg10[%c0_28, %c0_29] : memref<256x256xbf16, #tpu.memory_space<vmem>>, vector<256x256xbf16>
    %63 = arith.truncf %61 : vector<2x256xf32> to vector<2x256xbf16>
    %cst_30 = arith.constant dense<0.000000e+00> : vector<2x256xf32>
    %64 = tpu.matmul %63, %62, %cst_30 {dimension_numbers = #tpu.dot_dimension_numbers<[1], [0], [0], [1], [0, 0, 1, 1], [], []>} : vector<2x256xbf16>, vector<256x256xbf16>, vector<2x256xf32> -> vector<2x256xf32>
    %c0_31 = arith.constant 0 : index
    %c0_32 = arith.constant 0 : index
    %65 = vector.load %arg11[%c0_31, %c0_32] : memref<1x256xf32, #tpu.memory_space<vmem>>, vector<1x256xf32>
    %66 = vector.broadcast %65 : vector<1x256xf32> to vector<2x256xf32>
    %67 = arith.addf %64, %66 : vector<2x256xf32>
    %c0_33 = arith.constant 0 : index
    %c0_34 = arith.constant 0 : index
    %68 = vector.load %arg12[%c0_33, %c0_34] : memref<1x256xf32, #tpu.memory_space<vmem>>, vector<1x256xf32>
    %c0_35 = arith.constant 0 : index
    %c0_36 = arith.constant 0 : index
    %69 = vector.load %arg13[%c0_35, %c0_36] : memref<1x256xf32, #tpu.memory_space<vmem>>, vector<1x256xf32>
    %cst_37 = arith.constant dense<0.000000e+00> : vector<2xf32>
    %70 = vector.multi_reduction <add>, %67, %cst_37 [1] : vector<2x256xf32> to vector<2xf32>
    %71 = vector.shape_cast %70 : vector<2xf32> to vector<2x1xf32>
    %cst_38 = arith.constant 2.560000e+02 : f32
    %72 = vector.broadcast %cst_38 : f32 to vector<2x1xf32>
    %73 = arith.divf %71, %72 : vector<2x1xf32>
    %74 = arith.mulf %67, %67 : vector<2x256xf32>
    %cst_39 = arith.constant dense<0.000000e+00> : vector<2xf32>
    %75 = vector.multi_reduction <add>, %74, %cst_39 [1] : vector<2x256xf32> to vector<2xf32>
    %76 = vector.shape_cast %75 : vector<2xf32> to vector<2x1xf32>
    %cst_40 = arith.constant 2.560000e+02 : f32
    %77 = vector.broadcast %cst_40 : f32 to vector<2x1xf32>
    %78 = arith.divf %76, %77 : vector<2x1xf32>
    %79 = arith.mulf %73, %73 : vector<2x1xf32>
    %80 = arith.subf %78, %79 : vector<2x1xf32>
    %81 = vector.broadcast %73 : vector<2x1xf32> to vector<2x256xf32>
    %82 = arith.subf %67, %81 : vector<2x256xf32>
    %cst_41 = arith.constant 9.99999974E-6 : f32
    %83 = vector.broadcast %cst_41 : f32 to vector<2x1xf32>
    %84 = arith.addf %80, %83 : vector<2x1xf32>
    %85 = math.rsqrt %84 : vector<2x1xf32>
    %86 = vector.broadcast %85 : vector<2x1xf32> to vector<2x256xf32>
    %87 = arith.mulf %82, %86 : vector<2x256xf32>
    %88 = vector.broadcast %68 : vector<1x256xf32> to vector<2x256xf32>
    %89 = arith.mulf %87, %88 : vector<2x256xf32>
    %90 = vector.broadcast %69 : vector<1x256xf32> to vector<2x256xf32>
    %91 = arith.addf %89, %90 : vector<2x256xf32>
    %92 = arith.mulf %91, %91 : vector<2x256xf32>
    %93 = arith.mulf %92, %91 : vector<2x256xf32>
    %cst_42 = arith.constant 5.000000e-01 : f32
    %94 = vector.broadcast %cst_42 : f32 to vector<2x256xf32>
    %95 = arith.mulf %94, %91 : vector<2x256xf32>
    %cst_43 = arith.constant 4.471500e-02 : f32
    %96 = vector.broadcast %cst_43 : f32 to vector<2x256xf32>
    %97 = arith.mulf %96, %93 : vector<2x256xf32>
    %98 = arith.addf %91, %97 : vector<2x256xf32>
    %cst_44 = arith.constant 0.797884583 : f32
    %99 = vector.broadcast %cst_44 : f32 to vector<2x256xf32>
    %100 = arith.mulf %99, %98 : vector<2x256xf32>
    %101 = math.tanh %100 : vector<2x256xf32>
    %cst_45 = arith.constant 1.000000e+00 : f32
    %102 = vector.broadcast %cst_45 : f32 to vector<2x256xf32>
    %103 = arith.addf %102, %101 : vector<2x256xf32>
    %104 = arith.mulf %95, %103 : vector<2x256xf32>
    %c0_46 = arith.constant 0 : index
    %c0_47 = arith.constant 0 : index
    %105 = vector.load %arg14[%c0_46, %c0_47] : memref<256x256xbf16, #tpu.memory_space<vmem>>, vector<256x256xbf16>
    %106 = arith.truncf %104 : vector<2x256xf32> to vector<2x256xbf16>
    %cst_48 = arith.constant dense<0.000000e+00> : vector<2x256xf32>
    %107 = tpu.matmul %106, %105, %cst_48 {dimension_numbers = #tpu.dot_dimension_numbers<[1], [0], [0], [1], [0, 0, 1, 1], [], []>} : vector<2x256xbf16>, vector<256x256xbf16>, vector<2x256xf32> -> vector<2x256xf32>
    %c0_49 = arith.constant 0 : index
    %c0_50 = arith.constant 0 : index
    %108 = vector.load %arg15[%c0_49, %c0_50] : memref<1x256xf32, #tpu.memory_space<vmem>>, vector<1x256xf32>
    %109 = vector.broadcast %108 : vector<1x256xf32> to vector<2x256xf32>
    %110 = arith.addf %107, %109 : vector<2x256xf32>
    %c0_51 = arith.constant 0 : index
    %c0_52 = arith.constant 0 : index
    %111 = vector.load %arg16[%c0_51, %c0_52] : memref<2x256xf32, #tpu.memory_space<vmem>>, vector<2x256xf32>
    tpu.vector_store %arg16[%c0_51, %c0_52], %110 {strides = array<i32>} : memref<2x256xf32, #tpu.memory_space<vmem>>, vector<2x256xf32>,
    return
  }
  func.func @transform_0(%arg0: i32) -> (i32, i32) {
    %c0_i32 = arith.constant 0 : i32
    %c0_i32_0 = arith.constant 0 : i32
    return %arg0, %c0_i32 : i32, i32
  }
  func.func @transform_1(%arg0: i32) -> (i32, i32) {
    %c0_i32 = arith.constant 0 : i32
    %c0_i32_0 = arith.constant 0 : i32
    return %arg0, %c0_i32 : i32, i32
  }
  func.func @transform_2(%arg0: i32) -> (i32, i32) {
    %c0_i32 = arith.constant 0 : i32
    %c0_i32_0 = arith.constant 0 : i32
    %c0_i32_1 = arith.constant 0 : i32
    return %c0_i32, %c0_i32_0 : i32, i32
  }
  func.func @transform_3(%arg0: i32) -> (i32, i32) {
    %c0_i32 = arith.constant 0 : i32
    %c0_i32_0 = arith.constant 0 : i32
    %c0_i32_1 = arith.constant 0 : i32
    return %c0_i32, %c0_i32_0 : i32, i32
  }
  func.func @transform_4(%arg0: i32) -> (i32, i32) {
    %c0_i32 = arith.constant 0 : i32
    %c0_i32_0 = arith.constant 0 : i32
    %c0_i32_1 = arith.constant 0 : i32
    return %c0_i32, %c0_i32_0 : i32, i32
  }
  func.func @transform_5(%arg0: i32) -> (i32, i32) {
    %c0_i32 = arith.constant 0 : i32
    %c0_i32_0 = arith.constant 0 : i32
    %c0_i32_1 = arith.constant 0 : i32
    return %c0_i32, %c0_i32_0 : i32, i32
  }
  func.func @transform_6(%arg0: i32) -> (i32, i32) {
    %c0_i32 = arith.constant 0 : i32
    %c0_i32_0 = arith.constant 0 : i32
    %c0_i32_1 = arith.constant 0 : i32
    return %c0_i32, %c0_i32_0 : i32, i32
  }
  func.func @transform_7(%arg0: i32) -> (i32, i32) {
    %c0_i32 = arith.constant 0 : i32
    %c0_i32_0 = arith.constant 0 : i32
    %c0_i32_1 = arith.constant 0 : i32
    return %c0_i32, %c0_i32_0 : i32, i32
  }
  func.func @transform_8(%arg0: i32) -> (i32, i32) {
    %c0_i32 = arith.constant 0 : i32
    %c0_i32_0 = arith.constant 0 : i32
    %c0_i32_1 = arith.constant 0 : i32
    return %c0_i32, %c0_i32_0 : i32, i32
  }
  func.func @transform_9(%arg0: i32) -> (i32, i32) {
    %c0_i32 = arith.constant 0 : i32
    %c0_i32_0 = arith.constant 0 : i32
    %c0_i32_1 = arith.constant 0 : i32
    return %c0_i32, %c0_i32_0 : i32, i32
  }
  func.func @transform_10(%arg0: i32) -> (i32, i32) {
    %c0_i32 = arith.constant 0 : i32
    %c0_i32_0 = arith.constant 0 : i32
    %c0_i32_1 = arith.constant 0 : i32
    return %c0_i32, %c0_i32_0 : i32, i32
  }
  func.func @transform_11(%arg0: i32) -> (i32, i32) {
    %c0_i32 = arith.constant 0 : i32
    %c0_i32_0 = arith.constant 0 : i32
    %c0_i32_1 = arith.constant 0 : i32
    return %c0_i32, %c0_i32_0 : i32, i32
  }
  func.func @transform_12(%arg0: i32) -> (i32, i32) {
    %c0_i32 = arith.constant 0 : i32
    %c0_i32_0 = arith.constant 0 : i32
    %c0_i32_1 = arith.constant 0 : i32
    return %c0_i32, %c0_i32_0 : i32, i32
  }
  func.func @transform_13(%arg0: i32) -> (i32, i32) {
    %c0_i32 = arith.constant 0 : i32
    %c0_i32_0 = arith.constant 0 : i32
    %c0_i32_1 = arith.constant 0 : i32
    return %c0_i32, %c0_i32_0 : i32, i32
  }
  func.func @transform_14(%arg0: i32) -> (i32, i32) {
    %c0_i32 = arith.constant 0 : i32
    %c0_i32_0 = arith.constant 0 : i32
    %c0_i32_1 = arith.constant 0 : i32
    return %c0_i32, %c0_i32_0 : i32, i32
  }
  func.func @transform_15(%arg0: i32) -> (i32, i32) {
    %c0_i32 = arith.constant 0 : i32
    %c0_i32_0 = arith.constant 0 : i32
    return %arg0, %c0_i32 : i32, i32
  }
}

</mosaic_0001>

<llo_original>
// kernel: tpu_custom_call.1
$region0: #{tpu_custom_call.1}
  #allocation0 [shape = 'u32[]', space=smem, size = 0x4, offset = 0x4, fixed_abs, tag = 'smem constant byte address 0x4 - core index']
  #allocation1 [shape = 'u32[144,128]{1,0:T(1,128)}', space=vmem, size = 0x12000, scoped, tag = 'internal scratch']
  %s0 = inlined_call_operand.hbm [shape: f32[2,256], index: 0, kind: input, shape index: {}]
  %s1 = inlined_call_operand.vmem [shape: f32[2,1], index: 1, kind: input, shape index: {}]
  %s2 = inlined_call_operand.hbm [shape: f32[1,32], index: 2, kind: input, shape index: {}]
  %s3 = inlined_call_operand.hbm [shape: f32[1,32], index: 3, kind: input, shape index: {}]
  %s4 = inlined_call_operand.hbm [shape: bf16[32,256], index: 4, kind: input, shape index: {}]
  %s5 = inlined_call_operand.hbm [shape: bf16[256,256], index: 5, kind: input, shape index: {}]
  %s6 = inlined_call_operand.vmem [shape: f32[1,256], index: 6, kind: input, shape index: {}]
  %s7 = inlined_call_operand.vmem [shape: f32[1,256], index: 7, kind: input, shape index: {}]
  %s8 = inlined_call_operand.vmem [shape: f32[1,256], index: 8, kind: input, shape index: {}]
  %s9 = inlined_call_operand.hbm [shape: bf16[256,256], index: 9, kind: input, shape index: {}]
  %s10 = inlined_call_operand.vmem [shape: f32[1,256], index: 10, kind: input, shape index: {}]
  %s11 = inlined_call_operand.vmem [shape: f32[1,256], index: 11, kind: input, shape index: {}]
  %s12 = inlined_call_operand.vmem [shape: f32[1,256], index: 12, kind: input, shape index: {}]
  %s13 = inlined_call_operand.hbm [shape: bf16[256,256], index: 13, kind: input, shape index: {}]
  %s14 = inlined_call_operand.vmem [shape: f32[1,256], index: 14, kind: input, shape index: {}]
  %s15 = inlined_call_operand.hbm [shape: f32[2,256], index: 15, kind: output, shape index: {}]
  %s16 = sld [smem:[#allocation0]]
  $region98: #{tpu_custom_call.1} parent=0
    _
  %s18 = ssub.s32 1, %s16
  %s19 = scalar_select 0, %s18, %s16
  $region1: #{tpu_custom_call.1} parent=0
    #allocation2 [shape = 'u8[2048]{0}', space=vmem, size = 0x800, scoped, tag = 'input window, operand 0, single buffered']
    #allocation3 [shape = 's32[1]{0}', space=sflag, size = 0x4, scoped, tag = 'scoped memory for tpu_custom_call.1']
    #allocation4 [shape = 's32[1]{0}', space=sflag, size = 0x4, scoped, tag = 'scoped memory for tpu_custom_call.1']
    #allocation5 [shape = 'u8[512]{0}', space=vmem, size = 0x400, scoped, tag = 'input window, operand 2, single buffered']
    #allocation6 [shape = 's32[1]{0}', space=sflag, size = 0x4, scoped, tag = 'scoped memory for tpu_custom_call.1']
    #allocation7 [shape = 'u8[512]{0}', space=vmem, size = 0x400, scoped, tag = 'input window, operand 3, single buffered']
    #allocation8 [shape = 'u8[16384]{0}', space=vmem, size = 0x4000, scoped, tag = 'input window, operand 4, single buffered']
    #allocation9 [shape = 's32[1]{0}', space=sflag, size = 0x4, scoped, tag = 'scoped memory for tpu_custom_call.1']
    #allocation10 [shape = 'u8[131072]{0}', space=vmem, size = 0x20000, scoped, tag = 'input window, operand 5, single buffered']
    #allocation11 [shape = 'u8[131072]{0}', space=vmem, size = 0x20000, scoped, tag = 'input window, operand 9, single buffered']
    #allocation12 [shape = 's32[1]{0}', space=sflag, size = 0x4, scoped, tag = 'scoped memory for tpu_custom_call.1']
    #allocation13 [shape = 'u8[131072]{0}', space=vmem, size = 0x20000, scoped, tag = 'input window, operand 13, single buffered']
    #allocation14 [shape = 'u8[2048]{0}', space=vmem, size = 0x800, scoped, tag = 'output window, operand 0, single buffered']
    %20 = vsyncpa [#allocation3], 0
    %21 = vsyncpa [#allocation6], 0
    %22 = vsyncpa [#allocation9], 0
    %23 = vsyncpa [#allocation12], 0
    %24 = vsyncpa [#allocation4], 0
    // Predicated region
    $region2: #{tpu_custom_call.1} parent=1 // pred_check
      _
    $region3: #{tpu_custom_call.1} parent=1 // pred_check_branch
      %26 = sbr.rel (0) target = $region5
    $region4: #{tpu_custom_call.1} parent=1 // pred_region
      %s28 = ssub.s32 64, 64
      %29 = vsyncadd [#allocation3], %s28
      %s31 = sshll.u32 [#allocation2], 4
      %s32 = int_to_ptr.vmem [resolvable:$true] %s31
      %34 = dma.hbm_to_vmem [thread:$0]  %s0, 64, %s32, [#allocation3]
    $region5: #{tpu_custom_call.1} parent=1 // pred_fallthru
      _
    // Predicated region
    $region6: #{tpu_custom_call.1} parent=1 // pred_check
      _
    $region7: #{tpu_custom_call.1} parent=1 // pred_check_branch
      %36 = sbr.rel (0) target = $region9
    $region8: #{tpu_custom_call.1} parent=1 // pred_region
      _
    $region9: #{tpu_custom_call.1} parent=1 // pred_fallthru
      _
    // Predicated region
    $region10: #{tpu_custom_call.1} parent=1 // pred_check
      _
    $region11: #{tpu_custom_call.1} parent=1 // pred_check_branch
      %38 = sbr.rel (0) target = $region13
    $region12: #{tpu_custom_call.1} parent=1 // pred_region
      %s40 = ssub.s32 16, 16
      %41 = vsyncadd [#allocation6], %s40
      %s43 = sshll.u32 [#allocation5], 4
      %s44 = int_to_ptr.vmem [resolvable:$true] %s43
      %46 = dma.hbm_to_vmem [thread:$0]  %s2, 16, %s44, [#allocation6]
    $region13: #{tpu_custom_call.1} parent=1 // pred_fallthru
      _
    // Predicated region
    $region14: #{tpu_custom_call.1} parent=1 // pred_check
      _
    $region15: #{tpu_custom_call.1} parent=1 // pred_check_branch
      %48 = sbr.rel (0) target = $region17
    $region16: #{tpu_custom_call.1} parent=1 // pred_region
      %s50 = ssub.s32 16, 16
      %51 = vsyncadd [#allocation6], %s50
      %s53 = sshll.u32 [#allocation7], 4
      %s54 = int_to_ptr.vmem [resolvable:$true] %s53
      %56 = dma.hbm_to_vmem [thread:$0]  %s3, 16, %s54, [#allocation6]
    $region17: #{tpu_custom_call.1} parent=1 // pred_fallthru
      _
    // Predicated region
    $region18: #{tpu_custom_call.1} parent=1 // pred_check
      _
    $region19: #{tpu_custom_call.1} parent=1 // pred_check_branch
      %58 = sbr.rel (0) target = $region21
    $region20: #{tpu_custom_call.1} parent=1 // pred_region
      %s60 = ssub.s32 512, 512
      %61 = vsyncadd [#allocation9], %s60
      %s62 = sshll.u32 [#allocation8], 4
      %s63 = int_to_ptr.vmem [resolvable:$true] %s62
      %68 = dma.hbm_to_vmem [thread:$0]  %s4, 512, %s63, [#allocation9], 128, 128, 8
    $region21: #{tpu_custom_call.1} parent=1 // pred_fallthru
      _
    // Predicated region
    $region22: #{tpu_custom_call.1} parent=1 // pred_check
      _
    $region23: #{tpu_custom_call.1} parent=1 // pred_check_branch
      %70 = sbr.rel (0) target = $region25
    $region24: #{tpu_custom_call.1} parent=1 // pred_region
      %s72 = ssub.s32 4096, 4096
      %73 = vsyncadd [#allocation9], %s72
      %s74 = sshll.u32 [#allocation10], 4
      %s75 = int_to_ptr.vmem [resolvable:$true] %s74
      %80 = dma.hbm_to_vmem [thread:$0]  %s5, 4096, %s75, [#allocation9], 128, 128, 8
    $region25: #{tpu_custom_call.1} parent=1 // pred_fallthru
      _
    // Predicated region
    $region26: #{tpu_custom_call.1} parent=1 // pred_check
      _
    $region27: #{tpu_custom_call.1} parent=1 // pred_check_branch
      %82 = sbr.rel (0) target = $region29
    $region28: #{tpu_custom_call.1} parent=1 // pred_region
      _
    $region29: #{tpu_custom_call.1} parent=1 // pred_fallthru
      _
    // Predicated region
    $region30: #{tpu_custom_call.1} parent=1 // pred_check
      _
    $region31: #{tpu_custom_call.1} parent=1 // pred_check_branch
      %84 = sbr.rel (0) target = $region33
    $region32: #{tpu_custom_call.1} parent=1 // pred_region
      _
    $region33: #{tpu_custom_call.1} parent=1 // pred_fallthru
      _
    // Predicated region
    $region34: #{tpu_custom_call.1} parent=1 // pred_check
      _
    $region35: #{tpu_custom_call.1} parent=1 // pred_check_branch
      %86 = sbr.rel (0) target = $region37
    $region36: #{tpu_custom_call.1} parent=1 // pred_region
      _
    $region37: #{tpu_custom_call.1} parent=1 // pred_fallthru
      _
    // Predicated region
    $region38: #{tpu_custom_call.1} parent=1 // pred_check
      _
    $region39: #{tpu_custom_call.1} parent=1 // pred_check_branch
      %88 = sbr.rel (0) target = $region41
    $region40: #{tpu_custom_call.1} parent=1 // pred_region
      %s90 = ssub.s32 4096, 4096
      %91 = vsyncadd [#allocation12], %s90
      %s92 = sshll.u32 [#allocation11], 4
      %s93 = int_to_ptr.vmem [resolvable:$true] %s92
      %98 = dma.hbm_to_vmem [thread:$0]  %s9, 4096, %s93, [#allocation12], 128, 128, 8
    $region41: #{tpu_custom_call.1} parent=1 // pred_fallthru
      _
    // Predicated region
    $region42: #{tpu_custom_call.1} parent=1 // pred_check
      _
    $region43: #{tpu_custom_call.1} parent=1 // pred_check_branch
      %100 = sbr.rel (0) target = $region45
    $region44: #{tpu_custom_call.1} parent=1 // pred_region
      _
    $region45: #{tpu_custom_call.1} parent=1 // pred_fallthru
      _
    // Predicated region
    $region46: #{tpu_custom_call.1} parent=1 // pred_check
      _
    $region47: #{tpu_custom_call.1} parent=1 // pred_check_branch
      %102 = sbr.rel (0) target = $region49
    $region48: #{tpu_custom_call.1} parent=1 // pred_region
      _
    $region49: #{tpu_custom_call.1} parent=1 // pred_fallthru
      _
    // Predicated region
    $region50: #{tpu_custom_call.1} parent=1 // pred_check
      _
    $region51: #{tpu_custom_call.1} parent=1 // pred_check_branch
      %104 = sbr.rel (0) target = $region53
    $region52: #{tpu_custom_call.1} parent=1 // pred_region
      _
    $region53: #{tpu_custom_call.1} parent=1 // pred_fallthru
      _
    // Predicated region
    $region54: #{tpu_custom_call.1} parent=1 // pred_check
      _
    $region55: #{tpu_custom_call.1} parent=1 // pred_check_branch
      %106 = sbr.rel (0) target = $region57
    $region56: #{tpu_custom_call.1} parent=1 // pred_region
      %s108 = ssub.s32 4096, 4096
      %109 = vsyncadd [#allocation12], %s108
      %s110 = sshll.u32 [#allocation13], 4
      %s111 = int_to_ptr.vmem [resolvable:$true] %s110
      %116 = dma.hbm_to_vmem [thread:$0]  %s13, 4096, %s111, [#allocation12], 128, 128, 8
    $region57: #{tpu_custom_call.1} parent=1 // pred_fallthru
      _
    // Predicated region
    $region58: #{tpu_custom_call.1} parent=1 // pred_check
      _
    $region59: #{tpu_custom_call.1} parent=1 // pred_check_branch
      %118 = sbr.rel (0) target = $region61
    $region60: #{tpu_custom_call.1} parent=1 // pred_region
      _
    $region61: #{tpu_custom_call.1} parent=1 // pred_fallthru
      _
    // Predicated region
    $region62: #{tpu_custom_call.1} parent=1 // pred_check
      _
    $region63: #{tpu_custom_call.1} parent=1 // pred_check_branch
      %120 = sbr.rel (0) target = $region65
    $region64: #{tpu_custom_call.1} parent=1 // pred_region
      %121 = dma.done [#allocation3], 64
    $region65: #{tpu_custom_call.1} parent=1 // pred_fallthru
      _
    // Predicated region
    $region66: #{tpu_custom_call.1} parent=1 // pred_check
      _
    $region67: #{tpu_custom_call.1} parent=1 // pred_check_branch
      %123 = sbr.rel (0) target = $region69
    $region68: #{tpu_custom_call.1} parent=1 // pred_region
      %124 = dma.done [#allocation6], 16
    $region69: #{tpu_custom_call.1} parent=1 // pred_fallthru
      _
    // Predicated region
    $region70: #{tpu_custom_call.1} parent=1 // pred_check
      _
    $region71: #{tpu_custom_call.1} parent=1 // pred_check_branch
      %126 = sbr.rel (0) target = $region73
    $region72: #{tpu_custom_call.1} parent=1 // pred_region
      %127 = dma.done [#allocation6], 16
    $region73: #{tpu_custom_call.1} parent=1 // pred_fallthru
      _
    // Predicated region
    $region74: #{tpu_custom_call.1} parent=1 // pred_check
      _
    $region75: #{tpu_custom_call.1} parent=1 // pred_check_branch
      %129 = sbr.rel (0) target = $region77
    $region76: #{tpu_custom_call.1} parent=1 // pred_region
      %130 = dma.done [#allocation9], 512
    $region77: #{tpu_custom_call.1} parent=1 // pred_fallthru
      _
    // Predicated region
    $region78: #{tpu_custom_call.1} parent=1 // pred_check
      _
    $region79: #{tpu_custom_call.1} parent=1 // pred_check_branch
      %132 = sbr.rel (0) target = $region81
    $region80: #{tpu_custom_call.1} parent=1 // pred_region
      %133 = dma.done [#allocation9], 4096
    $region81: #{tpu_custom_call.1} parent=1 // pred_fallthru
      _
    // Predicated region
    $region82: #{tpu_custom_call.1} parent=1 // pred_check
      _
    $region83: #{tpu_custom_call.1} parent=1 // pred_check_branch
      %135 = sbr.rel (0) target = $region85
    $region84: #{tpu_custom_call.1} parent=1 // pred_region
      %136 = dma.done [#allocation12], 4096
    $region85: #{tpu_custom_call.1} parent=1 // pred_fallthru
      _
    // Predicated region
    $region86: #{tpu_custom_call.1} parent=1 // pred_check
      _
    $region87: #{tpu_custom_call.1} parent=1 // pred_check_branch
      %138 = sbr.rel (0) target = $region89
    $region88: #{tpu_custom_call.1} parent=1 // pred_region
      %139 = dma.done [#allocation12], 4096
    $region89: #{tpu_custom_call.1} parent=1 // pred_fallthru
      _
    %v141 = vld [vmem:[%s1] sm:$0x3]
    %v142 = vld [vmem:[#allocation5] sm:$0x1]
    %144 = vset.pattern.permute.xlu0 0
    %145 = vperm.xlu0 %144, %v141
    %v146 = vpop.permute.xlu0 %145
    %v149 = vlaneseq
    %v150 = vshrl.u32 %v149, 7
    %v151 = vsub.s32 0, %v150
    %v152 = vrot.slane %v142, %v151
    %v154 = vmul.f32 %v146, %v152
    %v155 = vld [vmem:[#allocation7] sm:$0x1]
    %v157 = vlaneseq
    %v158 = vshrl.u32 %v157, 7
    %v159 = vsub.s32 0, %v158
    %v160 = vrot.slane %v155, %v159
    %v162 = vadd.f32 %v154, %v160
    %v163 = vxor.u32 %v162, 2147483648
    %v164 = vmul.f32 %v163, 1.442695
    %v165 = vpow.pop %v164
    %v166 = vadd.f32 %v165, 1.0
    %v167 = vrcp.pop %v166
    %v168 = vmul.f32 1.0, %v167
    %v169 = vmul.f32 %v162, %v168
    %v170 = vld [vmem:[#allocation2] sm:$0xf]
    %v171 = vld [vmem:[#allocation10] sm:$0xff]
    %v172 = vld [vmem:[#allocation10 + $0x8] sm:$0xff]
    %v173 = vld [vmem:[#allocation10 + $0x10] sm:$0xff]
    %v174 = vld [vmem:[#allocation10 + $0x18] sm:$0xff]
    %v175 = vld [vmem:[#allocation10 + $0x20] sm:$0xff]
    %v176 = vld [vmem:[#allocation10 + $0x28] sm:$0xff]
    %v177 = vld [vmem:[#allocation10 + $0x30] sm:$0xff]
    %v178 = vld [vmem:[#allocation10 + $0x38] sm:$0xff]
    %v179 = vld [vmem:[#allocation10 + $0x40] sm:$0xff]
    %v180 = vld [vmem:[#allocation10 + $0x48] sm:$0xff]
    %v181 = vld [vmem:[#allocation10 + $0x50] sm:$0xff]
    %v182 = vld [vmem:[#allocation10 + $0x58] sm:$0xff]
    %v183 = vld [vmem:[#allocation10 + $0x60] sm:$0xff]
    %v184 = vld [vmem:[#allocation10 + $0x68] sm:$0xff]
    %v185 = vld [vmem:[#allocation10 + $0x70] sm:$0xff]
    %v186 = vld [vmem:[#allocation10 + $0x78] sm:$0xff]
    %v187 = vld [vmem:[#allocation10 + $0x80] sm:$0xff]
    %v188 = vld [vmem:[#allocation10 + $0x88] sm:$0xff]
    %v189 = vld [vmem:[#allocation10 + $0x90] sm:$0xff]
    %v190 = vld [vmem:[#allocation10 + $0x98] sm:$0xff]
    %v191 = vld [vmem:[#allocation10 + $0xa0] sm:$0xff]
    %v192 = vld [vmem:[#allocation10 + $0xa8] sm:$0xff]
    %v193 = vld [vmem:[#allocation10 + $0xb0] sm:$0xff]
    %v194 = vld [vmem:[#allocation10 + $0xb8] sm:$0xff]
    %v195 = vld [vmem:[#allocation10 + $0xc0] sm:$0xff]
    %v196 = vld [vmem:[#allocation10 + $0xc8] sm:$0xff]
    %v197 = vld [vmem:[#allocation10 + $0xd0] sm:$0xff]
    %v198 = vld [vmem:[#allocation10 + $0xd8] sm:$0xff]
    %v199 = vld [vmem:[#allocation10 + $0xe0] sm:$0xff]
    %v200 = vld [vmem:[#allocation10 + $0xe8] sm:$0xff]
    %v201 = vld [vmem:[#allocation10 + $0xf0] sm:$0xff]
    %v202 = vld [vmem:[#allocation10 + $0xf8] sm:$0xff]
    %v205 = vunpack.c.l.s4 1983009808
    %v206 = vunpack.c.0.s8 %v205
    %v207 = vlaneseq
    %v208 = vshrl.u32 %v207, 7
    %v209 = vsub.s32 %v206, %v208
    %v210 = vrot.slane %v170, %v209
    %v211 = vcombine.high %v210, %v210
    %v214 = vpack.c.bf16 %v210, %v210
    %v215 = vpack.c.bf16 %v211, %v211
    %v216 = vld [vmem:[#allocation8] sm:$0xff]
    %v217 = vld [vmem:[#allocation8 + $0x8] sm:$0xff]
    %v218 = vld [vmem:[#allocation8 + $0x10] sm:$0xff]
    %v219 = vld [vmem:[#allocation8 + $0x18] sm:$0xff]
    %v220 = vpack.c.bf16 %v169, %v169
    %v225 = vunpack.c.l.b16 %v216
    %v226 = vunpack.c.h.b16 %v216
    %v227 = vunpack.c.l.b16 %v217
    %v228 = vunpack.c.h.b16 %v217
    %v229 = vunpack.c.l.b16 %v218
    %v230 = vunpack.c.h.b16 %v218
    %v231 = vunpack.c.l.b16 %v219
    %v232 = vunpack.c.h.b16 %v219
    %v233 = vpack.c.b16 %v227, %v225
    %v234 = vpack.c.b16 %v228, %v226
    %v235 = vpack.c.b16 %v231, %v229
    %v236 = vpack.c.b16 %v232, %v230
    %vm241 = vcmask 261120
    %v243 = vsel %vm241, %v220, 0
    %245 = vmatprep.subr.bf16.mxu0 0
    %246 = vmatpush1.bf16.msra.mxu0 0
    %247 = vmatprep.subr.bf16.mxu0 0
    %248 = vmatpush1.bf16.msra.mxu0 0
    %249 = vmatprep.subr.bf16.mxu0 0
    %250 = vmatpush1.bf16.msra.mxu0 0
    %251 = vmatprep.subr.bf16.mxu0 0
    %252 = vmatpush1.bf16.msra.mxu0 0
    %253 = vmatprep.subr.bf16.mxu0 0
    %254 = vmatpush1.bf16.msra.mxu0 0
    %255 = vmatprep.subr.bf16.mxu0 0
    %256 = vmatpush1.bf16.msra.mxu0 0
    %257 = vmatprep.subr.bf16.mxu0 %v236
    %258 = vmatpush1.bf16.msra.mxu0 %v235
    %259 = vmatprep.subr.bf16.mxu0 %v234
    %260 = vmatpush1.bf16.msra.mxu0 %v233
    %261 = vmatprep.subr.bf16.mxu0 0
    %262 = vmatpush2.bf16.msra.mxu0 0
    %263 = vmatprep.subr.bf16.mxu0 0
    %264 = vmatpush2.bf16.msra.mxu0 0
    %265 = vmatprep.subr.bf16.mxu0 0
    %266 = vmatpush2.bf16.msra.mxu0 0
    %267 = vmatprep.subr.bf16.mxu0 0
    %268 = vmatpush2.bf16.msra.mxu0 0
    %269 = vmatprep.subr.bf16.mxu0 0
    %270 = vmatpush2.bf16.msra.mxu0 0
    %271 = vmatprep.subr.bf16.mxu0 0
    %272 = vmatpush2.bf16.msra.mxu0 0
    %273 = vmatprep.subr.bf16.mxu0 0
    %274 = vmatpush2.bf16.msra.mxu0 0
    %275 = vmatprep.subr.bf16.mxu0 0
    %276 = vmatpush2.bf16.msra.mxu0 0
    %277 = vmatprep.mubr.bf16.mxu0 0
    %278 = vmatmul.mubr.bf16.gmra.mxu0 %v243
    %v279 = vpop.f32.mrf.mxu0
    %v280 = vadd.f32 0.0, %v279
    %v281 = vpop.f32.mrf.mxu0
    %v282 = vadd.f32 0.0, %v281
    %v283 = vpop.f32.mrf.mxu0
    %v284 = vpop.f32.mrf.mxu0
    %285 = vdwg.mxu0
    %v318 = vunpack.c.l.b16 %v171
    %v319 = vunpack.c.h.b16 %v171
    %v320 = vunpack.c.l.b16 %v172
    %v321 = vunpack.c.h.b16 %v172
    %v322 = vunpack.c.l.b16 %v173
    %v323 = vunpack.c.h.b16 %v173
    %v324 = vunpack.c.l.b16 %v174
    %v325 = vunpack.c.h.b16 %v174
    %v326 = vunpack.c.l.b16 %v175
    %v327 = vunpack.c.h.b16 %v175
    %v328 = vunpack.c.l.b16 %v176
    %v329 = vunpack.c.h.b16 %v176
    %v330 = vunpack.c.l.b16 %v177
    %v331 = vunpack.c.h.b16 %v177
    %v332 = vunpack.c.l.b16 %v178
    %v333 = vunpack.c.h.b16 %v178
    %v334 = vunpack.c.l.b16 %v179
    %v335 = vunpack.c.h.b16 %v179
    %v336 = vunpack.c.l.b16 %v180
    %v337 = vunpack.c.h.b16 %v180
    %v338 = vunpack.c.l.b16 %v181
    %v339 = vunpack.c.h.b16 %v181
    %v340 = vunpack.c.l.b16 %v182
    %v341 = vunpack.c.h.b16 %v182
    %v342 = vunpack.c.l.b16 %v183
    %v343 = vunpack.c.h.b16 %v183
    %v344 = vunpack.c.l.b16 %v184
    %v345 = vunpack.c.h.b16 %v184
    %v346 = vunpack.c.l.b16 %v185
    %v347 = vunpack.c.h.b16 %v185
    %v348 = vunpack.c.l.b16 %v186
    %v349 = vunpack.c.h.b16 %v186
    %v350 = vunpack.c.l.b16 %v187
    %v351 = vunpack.c.h.b16 %v187
    %v352 = vunpack.c.l.b16 %v188
    %v353 = vunpack.c.h.b16 %v188
    %v354 = vunpack.c.l.b16 %v189
    %v355 = vunpack.c.h.b16 %v189
    %v356 = vunpack.c.l.b16 %v190
    %v357 = vunpack.c.h.b16 %v190
    %v358 = vunpack.c.l.b16 %v191
    %v359 = vunpack.c.h.b16 %v191
    %v360 = vunpack.c.l.b16 %v192
    %v361 = vunpack.c.h.b16 %v192
    %v362 = vunpack.c.l.b16 %v193
    %v363 = vunpack.c.h.b16 %v193
    %v364 = vunpack.c.l.b16 %v194
    %v365 = vunpack.c.h.b16 %v194
    %v366 = vunpack.c.l.b16 %v195
    %v367 = vunpack.c.h.b16 %v195
    %v368 = vunpack.c.l.b16 %v196
    %v369 = vunpack.c.h.b16 %v196
    %v370 = vunpack.c.l.b16 %v197
    %v371 = vunpack.c.h.b16 %v197
    %v372 = vunpack.c.l.b16 %v198
    %v373 = vunpack.c.h.b16 %v198
    %v374 = vunpack.c.l.b16 %v199
    %v375 = vunpack.c.h.b16 %v199
    %v376 = vunpack.c.l.b16 %v200
    %v377 = vunpack.c.h.b16 %v200
    %v378 = vunpack.c.l.b16 %v201
    %v379 = vunpack.c.h.b16 %v201
    %v380 = vunpack.c.l.b16 %v202
    %v381 = vunpack.c.h.b16 %v202
    %v382 = vpack.c.b16 %v320, %v318
    %v383 = vpack.c.b16 %v321, %v319
    %v384 = vpack.c.b16 %v324, %v322
    %v385 = vpack.c.b16 %v325, %v323
    %v386 = vpack.c.b16 %v328, %v326
    %v387 = vpack.c.b16 %v329, %v327
    %v388 = vpack.c.b16 %v332, %v330
    %v389 = vpack.c.b16 %v333, %v331
    %v390 = vpack.c.b16 %v336, %v334
    %v391 = vpack.c.b16 %v337, %v335
    %v392 = vpack.c.b16 %v340, %v338
    %v393 = vpack.c.b16 %v341, %v339
    %v394 = vpack.c.b16 %v344, %v342
    %v395 = vpack.c.b16 %v345, %v343
    %v396 = vpack.c.b16 %v348, %v346
    %v397 = vpack.c.b16 %v349, %v347
    %v398 = vpack.c.b16 %v352, %v350
    %v399 = vpack.c.b16 %v353, %v351
    %v400 = vpack.c.b16 %v356, %v354
    %v401 = vpack.c.b16 %v357, %v355
    %v402 = vpack.c.b16 %v360, %v358
    %v403 = vpack.c.b16 %v361, %v359
    %v404 = vpack.c.b16 %v364, %v362
    %v405 = vpack.c.b16 %v365, %v363
    %v406 = vpack.c.b16 %v368, %v366
    %v407 = vpack.c.b16 %v369, %v367
    %v408 = vpack.c.b16 %v372, %v370
    %v409 = vpack.c.b16 %v373, %v371
    %v410 = vpack.c.b16 %v376, %v374
    %v411 = vpack.c.b16 %v377, %v375
    %v412 = vpack.c.b16 %v380, %v378
    %v413 = vpack.c.b16 %v381, %v379
    %446 = vmatprep.subr.bf16.mxu0 %v397
    %447 = vmatpush1.bf16.msra.mxu0 %v396
    %448 = vmatprep.subr.bf16.mxu0 %v395
    %449 = vmatpush1.bf16.msra.mxu0 %v394
    %450 = vmatprep.subr.bf16.mxu0 %v393
    %451 = vmatpush1.bf16.msra.mxu0 %v392
    %452 = vmatprep.subr.bf16.mxu0 %v391
    %453 = vmatpush1.bf16.msra.mxu0 %v390
    %454 = vmatprep.subr.bf16.mxu0 %v389
    %455 = vmatpush1.bf16.msra.mxu0 %v388
    %456 = vmatprep.subr.bf16.mxu0 %v387
    %457 = vmatpush1.bf16.msra.mxu0 %v386
    %458 = vmatprep.subr.bf16.mxu0 %v385
    %459 = vmatpush1.bf16.msra.mxu0 %v384
    %460 = vmatprep.subr.bf16.mxu0 %v383
    %461 = vmatpush1.bf16.msra.mxu0 %v382
    %462 = vmatprep.subr.bf16.mxu0 %v413
    %463 = vmatpush2.bf16.msra.mxu0 %v412
    %464 = vmatprep.subr.bf16.mxu0 %v411
    %465 = vmatpush2.bf16.msra.mxu0 %v410
    %466 = vmatprep.subr.bf16.mxu0 %v409
    %467 = vmatpush2.bf16.msra.mxu0 %v408
    %468 = vmatprep.subr.bf16.mxu0 %v407
    %469 = vmatpush2.bf16.msra.mxu0 %v406
    %470 = vmatprep.subr.bf16.mxu0 %v405
    %471 = vmatpush2.bf16.msra.mxu0 %v404
    %472 = vmatprep.subr.bf16.mxu0 %v403
    %473 = vmatpush2.bf16.msra.mxu0 %v402
    %474 = vmatprep.subr.bf16.mxu0 %v401
    %475 = vmatpush2.bf16.msra.mxu0 %v400
    %476 = vmatprep.subr.bf16.mxu0 %v399
    %477 = vmatpush2.bf16.msra.mxu0 %v398
    %478 = vmatprep.mubr.bf16.mxu0 %v215
    %479 = vmatmul.mubr.bf16.gmra.mxu0 %v214
    %v480 = vpop.f32.mrf.mxu0
    %v481 = vadd.f32 %v280, %v480
    %v482 = vpop.f32.mrf.mxu0
    %v483 = vadd.f32 %v282, %v482
    %v484 = vpop.f32.mrf.mxu0
    %v485 = vpop.f32.mrf.mxu0
    %486 = vdwg.mxu0
    %v487 = vld [vmem:[%s6] sm:$0x3]
    %v489 = vlaneseq
    %v490 = vshrl.u32 %v489, 7
    %v491 = vsub.s32 0, %v490
    %v492 = vrot.slane %v487, %v491
    %v493 = vlaneseq
    %v494 = vshrl.u32 %v493, 7
    %v495 = vsub.s32 1, %v494
    %v496 = vrot.slane %v487, %v495
    %v499 = vadd.f32 %v481, %v492
    %v500 = vadd.f32 %v483, %v496
    %v501 = vld [vmem:[%s7] sm:$0x3]
    %v502 = vld [vmem:[%s8] sm:$0x3]
    %vm503 = vcmask 1041408
    %v504 = vsel %vm503, %v499, 0.0
    %v505 = vsel %vm503, %v500, 0.0
    %v506 = vadd.f32 %v504, %v505
    %507 = vadd.xlane.f32.xlu0 %v506
    %v508 = vpop.xlane.xlu0 %507
    %v509 = vrcp.pop 256.0
    %v510 = vmul.f32 %v508, %v509
    %v511 = vmul.f32 %v499, %v499
    %v512 = vmul.f32 %v500, %v500
    %v513 = vsel %vm503, %v511, 0.0
    %v514 = vsel %vm503, %v512, 0.0
    %v515 = vadd.f32 %v513, %v514
    %516 = vadd.xlane.f32.xlu0 %v515
    %v517 = vpop.xlane.xlu0 %516
    %v518 = vmul.f32 %v517, %v509
    %v519 = vmul.f32 %v510, %v510
    %v520 = vsub.f32 %v518, %v519
    %v521 = vsub.f32 %v499, %v510
    %v522 = vsub.f32 %v500, %v510
    %v523 = vadd.f32 %v520, 1e-05
    %v524 = vrsqrt.pop %v523
    %v525 = vmul.f32 %v521, %v524
    %v526 = vmul.f32 %v522, %v524
    %v528 = vlaneseq
    %v529 = vshrl.u32 %v528, 7
    %v530 = vsub.s32 0, %v529
    %v531 = vrot.slane %v501, %v530
    %v532 = vlaneseq
    %v533 = vshrl.u32 %v532, 7
    %v534 = vsub.s32 1, %v533
    %v535 = vrot.slane %v501, %v534
    %v538 = vmul.f32 %v525, %v531
    %v539 = vmul.f32 %v526, %v535
    %v541 = vlaneseq
    %v542 = vshrl.u32 %v541, 7
    %v543 = vsub.s32 0, %v542
    %v544 = vrot.slane %v502, %v543
    %v545 = vlaneseq
    %v546 = vshrl.u32 %v545, 7
    %v547 = vsub.s32 1, %v546
    %v548 = vrot.slane %v502, %v547
    %v551 = vadd.f32 %v538, %v544
    %v552 = vadd.f32 %v539, %v548
    %v553 = vmul.f32 %v551, %v551
    %v554 = vmul.f32 %v552, %v552
    %v555 = vmul.f32 %v553, %v551
    %v556 = vmul.f32 %v554, %v552
    %v557 = vmul.f32 %v551, 0.5
    %v558 = vmul.f32 %v552, 0.5
    %v559 = vmul.f32 %v555, 0.044715
    %v560 = vmul.f32 %v556, 0.044715
    %v561 = vadd.f32 %v551, %v559
    %v562 = vadd.f32 %v552, %v560
    %v563 = vmul.f32 %v561, 0.7978846
    %v564 = vmul.f32 %v562, 0.7978846
    %v565 = vtanh.pop %v563
    %v566 = vtanh.pop %v564
    %v567 = vadd.f32 %v565, 1.0
    %v568 = vadd.f32 %v566, 1.0
    %v569 = vmul.f32 %v557, %v567
    %v570 = vmul.f32 %v558, %v568
    %v571 = vld [vmem:[#allocation11] sm:$0xff]
    %v572 = vld [vmem:[#allocation11 + $0x8] sm:$0xff]
    %v573 = vld [vmem:[#allocation11 + $0x10] sm:$0xff]
    %v574 = vld [vmem:[#allocation11 + $0x18] sm:$0xff]
    %v575 = vld [vmem:[#allocation11 + $0x20] sm:$0xff]
    %v576 = vld [vmem:[#allocation11 + $0x28] sm:$0xff]
    %v577 = vld [vmem:[#allocation11 + $0x30] sm:$0xff]
    %v578 = vld [vmem:[#allocation11 + $0x38] sm:$0xff]
    %v579 = vld [vmem:[#allocation11 + $0x40] sm:$0xff]
    %v580 = vld [vmem:[#allocation11 + $0x48] sm:$0xff]
    %v581 = vld [vmem:[#allocation11 + $0x50] sm:$0xff]
    %v582 = vld [vmem:[#allocation11 + $0x58] sm:$0xff]
    %v583 = vld [vmem:[#allocation11 + $0x60] sm:$0xff]
    %v584 = vld [vmem:[#allocation11 + $0x68] sm:$0xff]
    %v585 = vld [vmem:[#allocation11 + $0x70] sm:$0xff]
    %v586 = vld [vmem:[#allocation11 + $0x78] sm:$0xff]
    %v587 = vld [vmem:[#allocation11 + $0x80] sm:$0xff]
    %v588 = vld [vmem:[#allocation11 + $0x88] sm:$0xff]
    %v589 = vld [vmem:[#allocation11 + $0x90] sm:$0xff]
    %v590 = vld [vmem:[#allocation11 + $0x98] sm:$0xff]
    %v591 = vld [vmem:[#allocation11 + $0xa0] sm:$0xff]
    %v592 = vld [vmem:[#allocation11 + $0xa8] sm:$0xff]
    %v593 = vld [vmem:[#allocation11 + $0xb0] sm:$0xff]
    %v594 = vld [vmem:[#allocation11 + $0xb8] sm:$0xff]
    %v595 = vld [vmem:[#allocation11 + $0xc0] sm:$0xff]
    %v596 = vld [vmem:[#allocation11 + $0xc8] sm:$0xff]
    %v597 = vld [vmem:[#allocation11 + $0xd0] sm:$0xff]
    %v598 = vld [vmem:[#allocation11 + $0xd8] sm:$0xff]
    %v599 = vld [vmem:[#allocation11 + $0xe0] sm:$0xff]
    %v600 = vld [vmem:[#allocation11 + $0xe8] sm:$0xff]
    %v601 = vld [vmem:[#allocation11 + $0xf0] sm:$0xff]
    %v602 = vld [vmem:[#allocation11 + $0xf8] sm:$0xff]
    %v603 = vpack.c.bf16 %v569, %v569
    %v604 = vpack.c.bf16 %v570, %v570
    %v605 = vld [vmem:[%s10] sm:$0x3]
    %v607 = vlaneseq
    %v608 = vshrl.u32 %v607, 7
    %v609 = vsub.s32 0, %v608
    %v610 = vrot.slane %v605, %v609
    %v611 = vlaneseq
    %v612 = vshrl.u32 %v611, 7
    %v613 = vsub.s32 1, %v612
    %v614 = vrot.slane %v605, %v613
    %v649 = vunpack.c.l.b16 %v571
    %v650 = vunpack.c.h.b16 %v571
    %v651 = vunpack.c.l.b16 %v572
    %v652 = vunpack.c.h.b16 %v572
    %v653 = vunpack.c.l.b16 %v573
    %v654 = vunpack.c.h.b16 %v573
    %v655 = vunpack.c.l.b16 %v574
    %v656 = vunpack.c.h.b16 %v574
    %v657 = vunpack.c.l.b16 %v575
    %v658 = vunpack.c.h.b16 %v575
    %v659 = vunpack.c.l.b16 %v576
    %v660 = vunpack.c.h.b16 %v576
    %v661 = vunpack.c.l.b16 %v577
    %v662 = vunpack.c.h.b16 %v577
    %v663 = vunpack.c.l.b16 %v578
    %v664 = vunpack.c.h.b16 %v578
    %v665 = vunpack.c.l.b16 %v579
    %v666 = vunpack.c.h.b16 %v579
    %v667 = vunpack.c.l.b16 %v580
    %v668 = vunpack.c.h.b16 %v580
    %v669 = vunpack.c.l.b16 %v581
    %v670 = vunpack.c.h.b16 %v581
    %v671 = vunpack.c.l.b16 %v582
    %v672 = vunpack.c.h.b16 %v582
    %v673 = vunpack.c.l.b16 %v583
    %v674 = vunpack.c.h.b16 %v583
    %v675 = vunpack.c.l.b16 %v584
    %v676 = vunpack.c.h.b16 %v584
    %v677 = vunpack.c.l.b16 %v585
    %v678 = vunpack.c.h.b16 %v585
    %v679 = vunpack.c.l.b16 %v586
    %v680 = vunpack.c.h.b16 %v586
    %v681 = vunpack.c.l.b16 %v587
    %v682 = vunpack.c.h.b16 %v587
    %v683 = vunpack.c.l.b16 %v588
    %v684 = vunpack.c.h.b16 %v588
    %v685 = vunpack.c.l.b16 %v589
    %v686 = vunpack.c.h.b16 %v589
    %v687 = vunpack.c.l.b16 %v590
    %v688 = vunpack.c.h.b16 %v590
    %v689 = vunpack.c.l.b16 %v591
    %v690 = vunpack.c.h.b16 %v591
    %v691 = vunpack.c.l.b16 %v592
    %v692 = vunpack.c.h.b16 %v592
    %v693 = vunpack.c.l.b16 %v593
    %v694 = vunpack.c.h.b16 %v593
    %v695 = vunpack.c.l.b16 %v594
    %v696 = vunpack.c.h.b16 %v594
    %v697 = vunpack.c.l.b16 %v595
    %v698 = vunpack.c.h.b16 %v595
    %v699 = vunpack.c.l.b16 %v596
    %v700 = vunpack.c.h.b16 %v596
    %v701 = vunpack.c.l.b16 %v597
    %v702 = vunpack.c.h.b16 %v597
    %v703 = vunpack.c.l.b16 %v598
    %v704 = vunpack.c.h.b16 %v598
    %v705 = vunpack.c.l.b16 %v599
    %v706 = vunpack.c.h.b16 %v599
    %v707 = vunpack.c.l.b16 %v600
    %v708 = vunpack.c.h.b16 %v600
    %v709 = vunpack.c.l.b16 %v601
    %v710 = vunpack.c.h.b16 %v601
    %v711 = vunpack.c.l.b16 %v602
    %v712 = vunpack.c.h.b16 %v602
    %v713 = vpack.c.b16 %v651, %v649
    %v714 = vpack.c.b16 %v652, %v650
    %v715 = vpack.c.b16 %v655, %v653
    %v716 = vpack.c.b16 %v656, %v654
    %v717 = vpack.c.b16 %v659, %v657
    %v718 = vpack.c.b16 %v660, %v658
    %v719 = vpack.c.b16 %v663, %v661
    %v720 = vpack.c.b16 %v664, %v662
    %v721 = vpack.c.b16 %v667, %v665
    %v722 = vpack.c.b16 %v668, %v666
    %v723 = vpack.c.b16 %v671, %v669
    %v724 = vpack.c.b16 %v672, %v670
    %v725 = vpack.c.b16 %v675, %v673
    %v726 = vpack.c.b16 %v676, %v674
    %v727 = vpack.c.b16 %v679, %v677
    %v728 = vpack.c.b16 %v680, %v678
    %v729 = vpack.c.b16 %v683, %v681
    %v730 = vpack.c.b16 %v684, %v682
    %v731 = vpack.c.b16 %v687, %v685
    %v732 = vpack.c.b16 %v688, %v686
    %v733 = vpack.c.b16 %v691, %v689
    %v734 = vpack.c.b16 %v692, %v690
    %v735 = vpack.c.b16 %v695, %v693
    %v736 = vpack.c.b16 %v696, %v694
    %v737 = vpack.c.b16 %v699, %v697
    %v738 = vpack.c.b16 %v700, %v698
    %v739 = vpack.c.b16 %v703, %v701
    %v740 = vpack.c.b16 %v704, %v702
    %v741 = vpack.c.b16 %v707, %v705
    %v742 = vpack.c.b16 %v708, %v706
    %v743 = vpack.c.b16 %v711, %v709
    %v744 = vpack.c.b16 %v712, %v710
    %777 = vmatprep.subr.bf16.mxu0 %v728
    %778 = vmatpush1.bf16.msra.mxu0 %v727
    %779 = vmatprep.subr.bf16.mxu0 %v726
    %780 = vmatpush1.bf16.msra.mxu0 %v725
    %781 = vmatprep.subr.bf16.mxu0 %v724
    %782 = vmatpush1.bf16.msra.mxu0 %v723
    %783 = vmatprep.subr.bf16.mxu0 %v722
    %784 = vmatpush1.bf16.msra.mxu0 %v721
    %785 = vmatprep.subr.bf16.mxu0 %v720
    %786 = vmatpush1.bf16.msra.mxu0 %v719
    %787 = vmatprep.subr.bf16.mxu0 %v718
    %788 = vmatpush1.bf16.msra.mxu0 %v717
    %789 = vmatprep.subr.bf16.mxu0 %v716
    %790 = vmatpush1.bf16.msra.mxu0 %v715
    %791 = vmatprep.subr.bf16.mxu0 %v714
    %792 = vmatpush1.bf16.msra.mxu0 %v713
    %793 = vmatprep.subr.bf16.mxu0 %v744
    %794 = vmatpush2.bf16.msra.mxu0 %v743
    %795 = vmatprep.subr.bf16.mxu0 %v742
    %796 = vmatpush2.bf16.msra.mxu0 %v741
    %797 = vmatprep.subr.bf16.mxu0 %v740
    %798 = vmatpush2.bf16.msra.mxu0 %v739
    %799 = vmatprep.subr.bf16.mxu0 %v738
    %800 = vmatpush2.bf16.msra.mxu0 %v737
    %801 = vmatprep.subr.bf16.mxu0 %v736
    %802 = vmatpush2.bf16.msra.mxu0 %v735
    %803 = vmatprep.subr.bf16.mxu0 %v734
    %804 = vmatpush2.bf16.msra.mxu0 %v733
    %805 = vmatprep.subr.bf16.mxu0 %v732
    %806 = vmatpush2.bf16.msra.mxu0 %v731
    %807 = vmatprep.subr.bf16.mxu0 %v730
    %808 = vmatpush2.bf16.msra.mxu0 %v729
    %809 = vmatprep.mubr.bf16.mxu0 %v604
    %810 = vmatmul.mubr.bf16.gmra.mxu0 %v603
    %v811 = vpop.f32.mrf.mxu0
    %v812 = vadd.f32 %v610, %v811
    %v813 = vpop.f32.mrf.mxu0
    %v814 = vadd.f32 %v614, %v813
    %v815 = vpop.f32.mrf.mxu0
    %v816 = vpop.f32.mrf.mxu0
    %817 = vdwg.mxu0
    %v818 = vld [vmem:[%s11] sm:$0x3]
    %v819 = vld [vmem:[%s12] sm:$0x3]
    %v820 = vsel %vm503, %v812, 0.0
    %v821 = vsel %vm503, %v814, 0.0
    %v822 = vadd.f32 %v820, %v821
    %823 = vadd.xlane.f32.xlu0 %v822
    %v824 = vpop.xlane.xlu0 %823
    %v825 = vmul.f32 %v824, %v509
    %v826 = vmul.f32 %v812, %v812
    %v827 = vmul.f32 %v814, %v814
    %v828 = vsel %vm503, %v826, 0.0
    %v829 = vsel %vm503, %v827, 0.0
    %v830 = vadd.f32 %v828, %v829
    %831 = vadd.xlane.f32.xlu0 %v830
    %v832 = vpop.xlane.xlu0 %831
    %v833 = vmul.f32 %v832, %v509
    %v834 = vmul.f32 %v825, %v825
    %v835 = vsub.f32 %v833, %v834
    %v836 = vsub.f32 %v812, %v825
    %v837 = vsub.f32 %v814, %v825
    %v838 = vadd.f32 %v835, 1e-05
    %v839 = vrsqrt.pop %v838
    %v840 = vmul.f32 %v836, %v839
    %v841 = vmul.f32 %v837, %v839
    %v843 = vlaneseq
    %v844 = vshrl.u32 %v843, 7
    %v845 = vsub.s32 0, %v844
    %v846 = vrot.slane %v818, %v845
    %v847 = vlaneseq
    %v848 = vshrl.u32 %v847, 7
    %v849 = vsub.s32 1, %v848
    %v850 = vrot.slane %v818, %v849
    %v853 = vmul.f32 %v840, %v846
    %v854 = vmul.f32 %v841, %v850
    %v856 = vlaneseq
    %v857 = vshrl.u32 %v856, 7
    %v858 = vsub.s32 0, %v857
    %v859 = vrot.slane %v819, %v858
    %v860 = vlaneseq
    %v861 = vshrl.u32 %v860, 7
    %v862 = vsub.s32 1, %v861
    %v863 = vrot.slane %v819, %v862
    %v866 = vadd.f32 %v853, %v859
    %v867 = vadd.f32 %v854, %v863
    %v868 = vmul.f32 %v866, %v866
    %v869 = vmul.f32 %v867, %v867
    %v870 = vmul.f32 %v868, %v866
    %v871 = vmul.f32 %v869, %v867
    %v872 = vmul.f32 %v866, 0.5
    %v873 = vmul.f32 %v867, 0.5
    %v874 = vmul.f32 %v870, 0.044715
    %v875 = vmul.f32 %v871, 0.044715
    %v876 = vadd.f32 %v866, %v874
    %v877 = vadd.f32 %v867, %v875
    %v878 = vmul.f32 %v876, 0.7978846
    %v879 = vmul.f32 %v877, 0.7978846
    %v880 = vtanh.pop %v878
    %v881 = vtanh.pop %v879
    %v882 = vadd.f32 %v880, 1.0
    %v883 = vadd.f32 %v881, 1.0
    %v884 = vmul.f32 %v872, %v882
    %v885 = vmul.f32 %v873, %v883
    %v886 = vld [vmem:[#allocation13] sm:$0xff]
    %v887 = vld [vmem:[#allocation13 + $0x8] sm:$0xff]
    %v888 = vld [vmem:[#allocation13 + $0x10] sm:$0xff]
    %v889 = vld [vmem:[#allocation13 + $0x18] sm:$0xff]
    %v890 = vld [vmem:[#allocation13 + $0x20] sm:$0xff]
    %v891 = vld [vmem:[#allocation13 + $0x28] sm:$0xff]
    %v892 = vld [vmem:[#allocation13 + $0x30] sm:$0xff]
    %v893 = vld [vmem:[#allocation13 + $0x38] sm:$0xff]
    %v894 = vld [vmem:[#allocation13 + $0x40] sm:$0xff]
    %v895 = vld [vmem:[#allocation13 + $0x48] sm:$0xff]
    %v896 = vld [vmem:[#allocation13 + $0x50] sm:$0xff]
    %v897 = vld [vmem:[#allocation13 + $0x58] sm:$0xff]
    %v898 = vld [vmem:[#allocation13 + $0x60] sm:$0xff]
    %v899 = vld [vmem:[#allocation13 + $0x68] sm:$0xff]
    %v900 = vld [vmem:[#allocation13 + $0x70] sm:$0xff]
    %v901 = vld [vmem:[#allocation13 + $0x78] sm:$0xff]
    %v902 = vld [vmem:[#allocation13 + $0x80] sm:$0xff]
    %v903 = vld [vmem:[#allocation13 + $0x88] sm:$0xff]
    %v904 = vld [vmem:[#allocation13 + $0x90] sm:$0xff]
    %v905 = vld [vmem:[#allocation13 + $0x98] sm:$0xff]
    %v906 = vld [vmem:[#allocation13 + $0xa0] sm:$0xff]
    %v907 = vld [vmem:[#allocation13 + $0xa8] sm:$0xff]
    %v908 = vld [vmem:[#allocation13 + $0xb0] sm:$0xff]
    %v909 = vld [vmem:[#allocation13 + $0xb8] sm:$0xff]
    %v910 = vld [vmem:[#allocation13 + $0xc0] sm:$0xff]
    %v911 = vld [vmem:[#allocation13 + $0xc8] sm:$0xff]
    %v912 = vld [vmem:[#allocation13 + $0xd0] sm:$0xff]
    %v913 = vld [vmem:[#allocation13 + $0xd8] sm:$0xff]
    %v914 = vld [vmem:[#allocation13 + $0xe0] sm:$0xff]
    %v915 = vld [vmem:[#allocation13 + $0xe8] sm:$0xff]
    %v916 = vld [vmem:[#allocation13 + $0xf0] sm:$0xff]
    %v917 = vld [vmem:[#allocation13 + $0xf8] sm:$0xff]
    %v918 = vpack.c.bf16 %v884, %v884
    %v919 = vpack.c.bf16 %v885, %v885
    %v920 = vld [vmem:[%s14] sm:$0x3]
    %v922 = vlaneseq
    %v923 = vshrl.u32 %v922, 7
    %v924 = vsub.s32 0, %v923
    %v925 = vrot.slane %v920, %v924
    %v926 = vlaneseq
    %v927 = vshrl.u32 %v926, 7
    %v928 = vsub.s32 1, %v927
    %v929 = vrot.slane %v920, %v928
    %v964 = vunpack.c.l.b16 %v886
    %v965 = vunpack.c.h.b16 %v886
    %v966 = vunpack.c.l.b16 %v887
    %v967 = vunpack.c.h.b16 %v887
    %v968 = vunpack.c.l.b16 %v888
    %v969 = vunpack.c.h.b16 %v888
    %v970 = vunpack.c.l.b16 %v889
    %v971 = vunpack.c.h.b16 %v889
    %v972 = vunpack.c.l.b16 %v890
    %v973 = vunpack.c.h.b16 %v890
    %v974 = vunpack.c.l.b16 %v891
    %v975 = vunpack.c.h.b16 %v891
    %v976 = vunpack.c.l.b16 %v892
    %v977 = vunpack.c.h.b16 %v892
    %v978 = vunpack.c.l.b16 %v893
    %v979 = vunpack.c.h.b16 %v893
    %v980 = vunpack.c.l.b16 %v894
    %v981 = vunpack.c.h.b16 %v894
    %v982 = vunpack.c.l.b16 %v895
    %v983 = vunpack.c.h.b16 %v895
    %v984 = vunpack.c.l.b16 %v896
    %v985 = vunpack.c.h.b16 %v896
    %v986 = vunpack.c.l.b16 %v897
    %v987 = vunpack.c.h.b16 %v897
    %v988 = vunpack.c.l.b16 %v898
    %v989 = vunpack.c.h.b16 %v898
    %v990 = vunpack.c.l.b16 %v899
    %v991 = vunpack.c.h.b16 %v899
    %v992 = vunpack.c.l.b16 %v900
    %v993 = vunpack.c.h.b16 %v900
    %v994 = vunpack.c.l.b16 %v901
    %v995 = vunpack.c.h.b16 %v901
    %v996 = vunpack.c.l.b16 %v902
    %v997 = vunpack.c.h.b16 %v902
    %v998 = vunpack.c.l.b16 %v903
    %v999 = vunpack.c.h.b16 %v903
    %v1000 = vunpack.c.l.b16 %v904
    %v1001 = vunpack.c.h.b16 %v904
    %v1002 = vunpack.c.l.b16 %v905
    %v1003 = vunpack.c.h.b16 %v905
    %v1004 = vunpack.c.l.b16 %v906
    %v1005 = vunpack.c.h.b16 %v906
    %v1006 = vunpack.c.l.b16 %v907
    %v1007 = vunpack.c.h.b16 %v907
    %v1008 = vunpack.c.l.b16 %v908
    %v1009 = vunpack.c.h.b16 %v908
    %v1010 = vunpack.c.l.b16 %v909
    %v1011 = vunpack.c.h.b16 %v909
    %v1012 = vunpack.c.l.b16 %v910
    %v1013 = vunpack.c.h.b16 %v910
    %v1014 = vunpack.c.l.b16 %v911
    %v1015 = vunpack.c.h.b16 %v911
    %v1016 = vunpack.c.l.b16 %v912
    %v1017 = vunpack.c.h.b16 %v912
    %v1018 = vunpack.c.l.b16 %v913
    %v1019 = vunpack.c.h.b16 %v913
    %v1020 = vunpack.c.l.b16 %v914
    %v1021 = vunpack.c.h.b16 %v914
    %v1022 = vunpack.c.l.b16 %v915
    %v1023 = vunpack.c.h.b16 %v915
    %v1024 = vunpack.c.l.b16 %v916
    %v1025 = vunpack.c.h.b16 %v916
    %v1026 = vunpack.c.l.b16 %v917
    %v1027 = vunpack.c.h.b16 %v917
    %v1028 = vpack.c.b16 %v966, %v964
    %v1029 = vpack.c.b16 %v967, %v965
    %v1030 = vpack.c.b16 %v970, %v968
    %v1031 = vpack.c.b16 %v971, %v969
    %v1032 = vpack.c.b16 %v974, %v972
    %v1033 = vpack.c.b16 %v975, %v973
    %v1034 = vpack.c.b16 %v978, %v976
    %v1035 = vpack.c.b16 %v979, %v977
    %v1036 = vpack.c.b16 %v982, %v980
    %v1037 = vpack.c.b16 %v983, %v981
    %v1038 = vpack.c.b16 %v986, %v984
    %v1039 = vpack.c.b16 %v987, %v985
    %v1040 = vpack.c.b16 %v990, %v988
    %v1041 = vpack.c.b16 %v991, %v989
    %v1042 = vpack.c.b16 %v994, %v992
    %v1043 = vpack.c.b16 %v995, %v993
    %v1044 = vpack.c.b16 %v998, %v996
    %v1045 = vpack.c.b16 %v999, %v997
    %v1046 = vpack.c.b16 %v1002, %v1000
    %v1047 = vpack.c.b16 %v1003, %v1001
    %v1048 = vpack.c.b16 %v1006, %v1004
    %v1049 = vpack.c.b16 %v1007, %v1005
    %v1050 = vpack.c.b16 %v1010, %v1008
    %v1051 = vpack.c.b16 %v1011, %v1009
    %v1052 = vpack.c.b16 %v1014, %v1012
    %v1053 = vpack.c.b16 %v1015, %v1013
    %v1054 = vpack.c.b16 %v1018, %v1016
    %v1055 = vpack.c.b16 %v1019, %v1017
    %v1056 = vpack.c.b16 %v1022, %v1020
    %v1057 = vpack.c.b16 %v1023, %v1021
    %v1058 = vpack.c.b16 %v1026, %v1024
    %v1059 = vpack.c.b16 %v1027, %v1025
    %1092 = vmatprep.subr.bf16.mxu0 %v1043
    %1093 = vmatpush1.bf16.msra.mxu0 %v1042
    %1094 = vmatprep.subr.bf16.mxu0 %v1041
    %1095 = vmatpush1.bf16.msra.mxu0 %v1040
    %1096 = vmatprep.subr.bf16.mxu0 %v1039
    %1097 = vmatpush1.bf16.msra.mxu0 %v1038
    %1098 = vmatprep.subr.bf16.mxu0 %v1037
    %1099 = vmatpush1.bf16.msra.mxu0 %v1036
    %1100 = vmatprep.subr.bf16.mxu0 %v1035
    %1101 = vmatpush1.bf16.msra.mxu0 %v1034
    %1102 = vmatprep.subr.bf16.mxu0 %v1033
    %1103 = vmatpush1.bf16.msra.mxu0 %v1032
    %1104 = vmatprep.subr.bf16.mxu0 %v1031
    %1105 = vmatpush1.bf16.msra.mxu0 %v1030
    %1106 = vmatprep.subr.bf16.mxu0 %v1029
    %1107 = vmatpush1.bf16.msra.mxu0 %v1028
    %1108 = vmatprep.subr.bf16.mxu0 %v1059
    %1109 = vmatpush2.bf16.msra.mxu0 %v1058
    %1110 = vmatprep.subr.bf16.mxu0 %v1057
    %1111 = vmatpush2.bf16.msra.mxu0 %v1056
    %1112 = vmatprep.subr.bf16.mxu0 %v1055
    %1113 = vmatpush2.bf16.msra.mxu0 %v1054
    %1114 = vmatprep.subr.bf16.mxu0 %v1053
    %1115 = vmatpush2.bf16.msra.mxu0 %v1052
    %1116 = vmatprep.subr.bf16.mxu0 %v1051
    %1117 = vmatpush2.bf16.msra.mxu0 %v1050
    %1118 = vmatprep.subr.bf16.mxu0 %v1049
    %1119 = vmatpush2.bf16.msra.mxu0 %v1048
    %1120 = vmatprep.subr.bf16.mxu0 %v1047
    %1121 = vmatpush2.bf16.msra.mxu0 %v1046
    %1122 = vmatprep.subr.bf16.mxu0 %v1045
    %1123 = vmatpush2.bf16.msra.mxu0 %v1044
    %1124 = vmatprep.mubr.bf16.mxu0 %v919
    %1125 = vmatmul.mubr.bf16.gmra.mxu0 %v918
    %v1126 = vpop.f32.mrf.mxu0
    %v1127 = vadd.f32 %v925, %v1126
    %v1128 = vpop.f32.mrf.mxu0
    %v1129 = vadd.f32 %v929, %v1128
    %v1130 = vpop.f32.mrf.mxu0
    %v1131 = vpop.f32.mrf.mxu0
    %1132 = vdwg.mxu0
    %v1135 = vcombine.low %v1127, %v1129
    %v1137 = vunpack.c.l.s4 1983009808
    %v1138 = vunpack.c.0.s8 %v1137
    %v1139 = vlaneseq
    %v1140 = vshrl.u32 %v1139, 7
    %v1141 = vsub.s32 %v1138, %v1140
    %v1142 = vrot.slane %v1135, %v1141
    %1144 = vst [vmem:[#allocation14] sm:$0xf] %v1142
    // Predicated region
    $region90: #{tpu_custom_call.1} parent=1 // pred_check
      _
    $region91: #{tpu_custom_call.1} parent=1 // pred_check_branch
      %1146 = sbr.rel (0) target = $region93
    $region92: #{tpu_custom_call.1} parent=1 // pred_region
      %s1148 = ssub.s32 64, 64
      %1149 = vsyncadd [#allocation4], %s1148
      %s1151 = sshll.u32 [#allocation14], 4
      %s1152 = int_to_ptr.vmem [resolvable:$true] %s1151
      %1154 = dma.vmem_to_hbm [thread:$0]  %s1152, 64, %s15, [#allocation4]
    $region93: #{tpu_custom_call.1} parent=1 // pred_fallthru
      _
    // Predicated region
    $region94: #{tpu_custom_call.1} parent=1 // pred_check
      _
    $region95: #{tpu_custom_call.1} parent=1 // pred_check_branch
      %1156 = sbr.rel (0) target = $region97
    $region96: #{tpu_custom_call.1} parent=1 // pred_region
      %1157 = dma.done [#allocation4], 64
    $region97: #{tpu_custom_call.1} parent=1 // pred_fallthru
      _
    %1158 = vsyncpa [#allocation3], 1
    %1159 = vsyncpa [#allocation6], 1
    %1160 = vsyncpa [#allocation9], 1
    %1161 = vsyncpa [#allocation12], 1
    %1162 = vsyncpa [#allocation4], 1

</llo_original>
